<compile_context>
chip_gen: v6e
topology: v6e:2x2x1
jax: 0.10.0
libtpu: 0.0.40
codegen_flags: <defaults>
</compile_context>

<pallas_src>
import jax
import jax.numpy as jnp
from jax.experimental import pallas as pl
from jax.experimental.pallas import tpu as pltpu

# ----------------------------- hyper-params ---------------------------------
PARAMS = {
    "n_extracted_features": 16,
    "n_external_features": 16,
    "predict_hidden_1": 64,
    "predict_hidden_2": 32,
    "n_output_steps": 8,
}

BATCH = 128                 # rows
C, H, W = 4, 8, 8           # encoder input spatial shape (NCHW)
ENC_IN = C * H * W          # flattened encoder input features (256)
K_FUSED = ENC_IN + PARAMS["n_external_features"]   # 272, multiple of 16
OUT_PAD = 128               # lane-dense output slab width


# ------------------------------- kernel -------------------------------------
def predict_kernel(xc_ref, w1_ref, b1_ref, w2_ref, b2_ref, w3_ref, b3_ref,
                   out_ref):
    # Single fused first layer: h1 = relu([x_flat | ext] @ W1_stacked + b1_fused)
    xc = xc_ref[...].astype(jnp.bfloat16)        # in-kernel cast (VPU, hidden)
    h1 = jnp.dot(xc, w1_ref[...], preferred_element_type=jnp.float32)
    h1 = jnp.maximum(h1 + b1_ref[...], 0.0)

    # h2 = relu(h1 @ W2 + b2)
    h2 = jnp.dot(h1.astype(jnp.bfloat16), w2_ref[...],
                 preferred_element_type=jnp.float32) + b2_ref[...]
    h2 = jnp.maximum(h2, 0.0)

    # out = h2 @ W3_pad + b3_pad  -> [tile_b, 128] lane-dense f32 slab
    out_ref[...] = jnp.dot(h2.astype(jnp.bfloat16), w3_ref[...],
                           preferred_element_type=jnp.float32) + b3_ref[...]


# --------------------------- weight preparation -------------------------------
def prepare_fused_weights(weights):
    """Fold the linear encoder into fc1, stack the encoder-folded and external
    halves of W1 along K into one matrix, pad fc3 to a 128-lane output slab,
    and cast MXU operands to bf16 (biases stay f32)."""
    we, be, w1, b1, w2, b2, w3, b3 = weights
    n_ext = PARAMS["n_extracted_features"]

    w1_top = w1[:n_ext]                     # [n_extracted, H1]
    w1_bot = w1[n_ext:]                     # [n_external,  H1]
    w1_enc = we @ w1_top                    # [ENC_IN, H1]  (exact fusion, f32)
    b1_fused = be @ w1_top + b1             # [1, H1]
    w1_stacked = jnp.concatenate([w1_enc, w1_bot], axis=0)   # [K_FUSED, H1]

    pad = OUT_PAD - w3.shape[1]
    w3_pad = jnp.pad(w3, ((0, 0), (0, pad)))
    b3_pad = jnp.pad(b3, ((0, 0), (0, pad)))

    return (w1_stacked.astype(jnp.bfloat16),
            b1_fused.astype(jnp.float32),
            w2.astype(jnp.bfloat16),
            b2.astype(jnp.float32),
            w3_pad.astype(jnp.bfloat16),
            b3_pad.astype(jnp.float32))


# ------------------------------- wrapper -------------------------------------
def predict_forward(x_input, external, fused, *, tile_b=None):
    """x_input: [B, C, H, W] float32 (NCHW), external: [B, n_external] f32.

    Default tile_b = B (single grid step): right call on single-TC v5e/v6e.
    On v7x, benchmark tile_b = B // 2 (grid=2, 'parallel') against tile_b = B.
    """
    b = x_input.shape[0]
    if tile_b is None:
        tile_b = b
    assert b % tile_b == 0, "batch must be divisible by the batch tile"
    grid = (b // tile_b,)

    # Glue reshape + K-axis concat stay f32; the bf16 cast lives in the kernel.
    x_flat = x_input.reshape(b, -1)
    xc = jnp.concatenate([x_flat, external.astype(x_flat.dtype)], axis=-1)

    w1, b1, w2, b2, w3, b3 = fused
    k_fused = xc.shape[1]

    def full_spec(a):
        # Full-array block, same block index every grid step (stays resident).
        return pl.BlockSpec(a.shape, lambda i: (0, 0))

    semantics = ("parallel",) if grid[0] > 1 else ("arbitrary",)

    out_full = pl.pallas_call(
        predict_kernel,
        out_shape=jax.ShapeDtypeStruct((b, OUT_PAD), jnp.float32),
        grid=grid,
        in_specs=[
            pl.BlockSpec((tile_b, k_fused), lambda i: (i, 0)),   # [x_flat|ext]
            full_spec(w1), full_spec(b1),
            full_spec(w2), full_spec(b2),
            full_spec(w3), full_spec(b3),
        ],
        out_specs=pl.BlockSpec((tile_b, OUT_PAD), lambda i: (i, 0)),
        compiler_params=pltpu.CompilerParams(dimension_semantics=semantics),
    )(xc, w1, b1, w2, b2, w3, b3)

    # NOTE: consumers that tolerate a padded slab can take `out_full` directly
    # and skip this tiny XLA slice; sliced here to match the module's output.
    return out_full[:, :PARAMS["n_output_steps"]]


# --------------------------- deterministic init -------------------------------
def init_weights(key):
    p = PARAMS
    dims = [
        (ENC_IN, p["n_extracted_features"]),                                   # encoder
        (p["n_extracted_features"] + p["n_external_features"],
         p["predict_hidden_1"]),                                               # fc1
        (p["predict_hidden_1"], p["predict_hidden_2"]),                        # fc2
        (p["predict_hidden_2"], p["n_output_steps"]),                          # fc3
    ]
    weights = []
    for (fan_in, fan_out) in dims:
        key, kw, kb = jax.random.split(key, 3)
        bound = 1.0 / jnp.sqrt(fan_in)
        w = jax.random.uniform(kw, (fan_in, fan_out), jnp.float32, -bound, bound)
        b = jax.random.uniform(kb, (1, fan_out), jnp.float32, -bound, bound)
        weights += [w, b]
    return tuple(weights)


# ------------------------------ pure-JAX refs ----------------------------------
def predict_ref_f32(x_input, external, weights):
    """Original module structure (encoder -> concat -> MLP), pure f32."""
    we, be, w1, b1, w2, b2, w3, b3 = weights
    x_flat = x_input.reshape(x_input.shape[0], -1)
    extracted = x_flat @ we + be
    xc = jnp.concatenate([extracted, external], axis=-1)
    h1 = jnp.maximum(xc @ w1 + b1, 0.0)
    h2 = jnp.maximum(h1 @ w2 + b2, 0.0)
    return h2 @ w3 + b3


def predict_ref_fused(x_input, external, fused):
    """Mirror of the kernel math (fused weights, bf16 operands, f32 accum)."""
    w1, b1, w2, b2, w3, b3 = fused
    b = x_input.shape[0]
    xc = jnp.concatenate([x_input.reshape(b, -1), external], axis=-1)
    xc = xc.astype(jnp.bfloat16)
    h1 = jnp.maximum(
        jnp.dot(xc, w1, preferred_element_type=jnp.float32) + b1, 0.0)
    h2 = jnp.maximum(jnp.dot(h1.astype(jnp.bfloat16), w2,
                             preferred_element_type=jnp.float32) + b2, 0.0)
    out = jnp.dot(h2.astype(jnp.bfloat16), w3,
                  preferred_element_type=jnp.float32) + b3
    return out[:, :PARAMS["n_output_steps"]]


# --------------------------------- main ---------------------------------------
if __name__ == "__main__":
    key = jax.random.PRNGKey(0)
    kx, kext, kw = jax.random.split(key, 3)

    x_input = jax.random.normal(kx, (BATCH, C, H, W), jnp.float32)
    external = jax.random.normal(kext, (BATCH, PARAMS["n_external_features"]),
                                 jnp.float32)
    weights = init_weights(kw)
    fused = prepare_fused_weights(weights)

    out = predict_forward(x_input, external, fused)
    out = jax.block_until_ready(out)
    assert out.shape == (BATCH, PARAMS["n_output_steps"])

    # Exact-structure check against a reference that mirrors the kernel math.
    ref_fused = predict_ref_fused(x_input, external, fused)
    assert jnp.allclose(out, ref_fused, atol=1e-2, rtol=1e-2)

    # Sanity check against the original (unfused, f32) module semantics;
    # tolerance loosened for the bf16 MXU operands.
    ref_f32 = predict_ref_f32(x_input, external, weights)
    assert jnp.allclose(out, ref_f32, atol=3e-2, rtol=3e-2)

    print("KERNEL_OK")
</pallas_src>

<mosaic_0001>
module attributes {stable_mosaic.version = 11 : i64} {
  func.func @predict_kernel(%arg0: i32, %arg1: memref<128x272xf32, #tpu.memory_space<vmem>>, %arg2: memref<272x64xbf16, #tpu.memory_space<vmem>>, %arg3: memref<1x64xf32, #tpu.memory_space<vmem>>, %arg4: memref<64x32xbf16, #tpu.memory_space<vmem>>, %arg5: memref<1x32xf32, #tpu.memory_space<vmem>>, %arg6: memref<32x128xbf16, #tpu.memory_space<vmem>>, %arg7: memref<1x128xf32, #tpu.memory_space<vmem>>, %arg8: memref<128x128xf32, #tpu.memory_space<vmem>>) attributes {dimension_semantics = [#tpu.dimension_semantics<arbitrary>], iteration_bounds = array<i64: 1>, scalar_prefetch = 0 : i64, scratch_operands = 0 : i64, tpu.core_type = #tpu.core_type<tc>, window_params = [{transform_indices = @transform_0, window_bounds = array<i64: 128, 272>}, {pipeline_mode = #tpu.pipeline_mode<synchronous>, transform_indices = @transform_1, window_bounds = array<i64: 272, 64>}, {pipeline_mode = #tpu.pipeline_mode<synchronous>, transform_indices = @transform_2, window_bounds = array<i64: 1, 64>}, {pipeline_mode = #tpu.pipeline_mode<synchronous>, transform_indices = @transform_3, window_bounds = array<i64: 64, 32>}, {pipeline_mode = #tpu.pipeline_mode<synchronous>, transform_indices = @transform_4, window_bounds = array<i64: 1, 32>}, {pipeline_mode = #tpu.pipeline_mode<synchronous>, transform_indices = @transform_5, window_bounds = array<i64: 32, 128>}, {pipeline_mode = #tpu.pipeline_mode<synchronous>, transform_indices = @transform_6, window_bounds = array<i64: 1, 128>}, {transform_indices = @transform_7, window_bounds = array<i64: 128, 128>}]} {
    %c0 = arith.constant 0 : index
    %c0_0 = arith.constant 0 : index
    %0 = vector.load %arg1[%c0, %c0_0] : memref<128x272xf32, #tpu.memory_space<vmem>>, vector<128x272xf32>
    %1 = arith.truncf %0 : vector<128x272xf32> to vector<128x272xbf16>
    %c0_1 = arith.constant 0 : index
    %c0_2 = arith.constant 0 : index
    %2 = vector.load %arg2[%c0_1, %c0_2] : memref<272x64xbf16, #tpu.memory_space<vmem>>, vector<272x64xbf16>
    %cst = arith.constant dense<0.000000e+00> : vector<128x64xf32>
    %3 = tpu.matmul %1, %2, %cst {dimension_numbers = #tpu.dot_dimension_numbers<[1], [0], [0], [1], [0, 0, 1, 1], [], []>} : vector<128x272xbf16>, vector<272x64xbf16>, vector<128x64xf32> -> vector<128x64xf32>
    %c0_3 = arith.constant 0 : index
    %c0_4 = arith.constant 0 : index
    %4 = vector.load %arg3[%c0_3, %c0_4] : memref<1x64xf32, #tpu.memory_space<vmem>>, vector<1x64xf32>
    %5 = vector.broadcast %4 : vector<1x64xf32> to vector<128x64xf32>
    %6 = arith.addf %3, %5 : vector<128x64xf32>
    %cst_5 = arith.constant 0.000000e+00 : f32
    %7 = vector.broadcast %cst_5 : f32 to vector<128x64xf32>
    %8 = arith.maximumf %6, %7 : vector<128x64xf32>
    %9 = arith.truncf %8 : vector<128x64xf32> to vector<128x64xbf16>
    %c0_6 = arith.constant 0 : index
    %c0_7 = arith.constant 0 : index
    %10 = vector.load %arg4[%c0_6, %c0_7] : memref<64x32xbf16, #tpu.memory_space<vmem>>, vector<64x32xbf16>
    %cst_8 = arith.constant dense<0.000000e+00> : vector<128x32xf32>
    %11 = tpu.matmul %9, %10, %cst_8 {dimension_numbers = #tpu.dot_dimension_numbers<[1], [0], [0], [1], [0, 0, 1, 1], [], []>} : vector<128x64xbf16>, vector<64x32xbf16>, vector<128x32xf32> -> vector<128x32xf32>
    %c0_9 = arith.constant 0 : index
    %c0_10 = arith.constant 0 : index
    %12 = vector.load %arg5[%c0_9, %c0_10] : memref<1x32xf32, #tpu.memory_space<vmem>>, vector<1x32xf32>
    %13 = vector.broadcast %12 : vector<1x32xf32> to vector<128x32xf32>
    %14 = arith.addf %11, %13 : vector<128x32xf32>
    %cst_11 = arith.constant 0.000000e+00 : f32
    %15 = vector.broadcast %cst_11 : f32 to vector<128x32xf32>
    %16 = arith.maximumf %14, %15 : vector<128x32xf32>
    %17 = arith.truncf %16 : vector<128x32xf32> to vector<128x32xbf16>
    %c0_12 = arith.constant 0 : index
    %c0_13 = arith.constant 0 : index
    %18 = vector.load %arg6[%c0_12, %c0_13] : memref<32x128xbf16, #tpu.memory_space<vmem>>, vector<32x128xbf16>
    %cst_14 = arith.constant dense<0.000000e+00> : vector<128x128xf32>
    %19 = tpu.matmul %17, %18, %cst_14 {dimension_numbers = #tpu.dot_dimension_numbers<[1], [0], [0], [1], [0, 0, 1, 1], [], []>} : vector<128x32xbf16>, vector<32x128xbf16>, vector<128x128xf32> -> vector<128x128xf32>
    %c0_15 = arith.constant 0 : index
    %c0_16 = arith.constant 0 : index
    %20 = vector.load %arg7[%c0_15, %c0_16] : memref<1x128xf32, #tpu.memory_space<vmem>>, vector<1x128xf32>
    %21 = vector.broadcast %20 : vector<1x128xf32> to vector<128x128xf32>
    %22 = arith.addf %19, %21 : vector<128x128xf32>
    %c0_17 = arith.constant 0 : index
    %c0_18 = arith.constant 0 : index
    %23 = vector.load %arg8[%c0_17, %c0_18] : memref<128x128xf32, #tpu.memory_space<vmem>>, vector<128x128xf32>
    tpu.vector_store %arg8[%c0_17, %c0_18], %22 {strides = array<i32>} : memref<128x128xf32, #tpu.memory_space<vmem>>, vector<128x128xf32>,
    return
  }
  func.func @transform_0(%arg0: i32) -> (i32, i32) {
    %c0_i32 = arith.constant 0 : i32
    %c0_i32_0 = arith.constant 0 : i32
    return %arg0, %c0_i32 : i32, i32
  }
  func.func @transform_1(%arg0: i32) -> (i32, i32) {
    %c0_i32 = arith.constant 0 : i32
    %c0_i32_0 = arith.constant 0 : i32
    %c0_i32_1 = arith.constant 0 : i32
    return %c0_i32, %c0_i32_0 : i32, i32
  }
  func.func @transform_2(%arg0: i32) -> (i32, i32) {
    %c0_i32 = arith.constant 0 : i32
    %c0_i32_0 = arith.constant 0 : i32
    %c0_i32_1 = arith.constant 0 : i32
    return %c0_i32, %c0_i32_0 : i32, i32
  }
  func.func @transform_3(%arg0: i32) -> (i32, i32) {
    %c0_i32 = arith.constant 0 : i32
    %c0_i32_0 = arith.constant 0 : i32
    %c0_i32_1 = arith.constant 0 : i32
    return %c0_i32, %c0_i32_0 : i32, i32
  }
  func.func @transform_4(%arg0: i32) -> (i32, i32) {
    %c0_i32 = arith.constant 0 : i32
    %c0_i32_0 = arith.constant 0 : i32
    %c0_i32_1 = arith.constant 0 : i32
    return %c0_i32, %c0_i32_0 : i32, i32
  }
  func.func @transform_5(%arg0: i32) -> (i32, i32) {
    %c0_i32 = arith.constant 0 : i32
    %c0_i32_0 = arith.constant 0 : i32
    %c0_i32_1 = arith.constant 0 : i32
    return %c0_i32, %c0_i32_0 : i32, i32
  }
  func.func @transform_6(%arg0: i32) -> (i32, i32) {
    %c0_i32 = arith.constant 0 : i32
    %c0_i32_0 = arith.constant 0 : i32
    %c0_i32_1 = arith.constant 0 : i32
    return %c0_i32, %c0_i32_0 : i32, i32
  }
  func.func @transform_7(%arg0: i32) -> (i32, i32) {
    %c0_i32 = arith.constant 0 : i32
    %c0_i32_0 = arith.constant 0 : i32
    return %arg0, %c0_i32 : i32, i32
  }
}

</mosaic_0001>

<llo_original>
// kernel: tpu_custom_call.1
$region0: #{tpu_custom_call.1}
  #allocation0 [shape = 'u32[]', space=smem, size = 0x4, offset = 0x4, fixed_abs, tag = 'smem constant byte address 0x4 - core index']
  #allocation1 [shape = 'u32[144,128]{1,0:T(1,128)}', space=vmem, size = 0x12000, scoped, tag = 'internal scratch']
  %s0 = inlined_call_operand.vmem [shape: f32[128,272], index: 0, kind: input, shape index: {}]
  %s1 = inlined_call_operand.vmem [shape: bf16[272,64], index: 1, kind: input, shape index: {}]
  %s2 = inlined_call_operand.vmem [shape: f32[1,64], index: 2, kind: input, shape index: {}]
  %s3 = inlined_call_operand.vmem [shape: bf16[64,32], index: 3, kind: input, shape index: {}]
  %s4 = inlined_call_operand.vmem [shape: f32[1,32], index: 4, kind: input, shape index: {}]
  %s5 = inlined_call_operand.vmem [shape: bf16[32,128], index: 5, kind: input, shape index: {}]
  %s6 = inlined_call_operand.vmem [shape: f32[1,128], index: 6, kind: input, shape index: {}]
  %s7 = inlined_call_operand.hbm [shape: f32[128,128], index: 7, kind: output, shape index: {}]
  %s8 = sld [smem:[#allocation0]]
  $region38: #{tpu_custom_call.1} parent=0
    _
  %s10 = ssub.s32 1, %s8
  %s11 = scalar_select 0, %s10, %s8
  $region1: #{tpu_custom_call.1} parent=0
    #allocation2 [shape = 'u8[65536]{0}', space=vmem, size = 0x10000, scoped, tag = 'output window, operand 0, single buffered']
    #allocation3 [shape = 's32[1]{0}', space=sflag, size = 0x4, scoped, tag = 'scoped memory for tpu_custom_call.1']
    %12 = vsyncpa [#allocation3], 0
    // Predicated region
    $region2: #{tpu_custom_call.1} parent=1 // pred_check
      _
    $region3: #{tpu_custom_call.1} parent=1 // pred_check_branch
      %14 = sbr.rel (0) target = $region5
    $region4: #{tpu_custom_call.1} parent=1 // pred_region
      _
    $region5: #{tpu_custom_call.1} parent=1 // pred_fallthru
      _
    // Predicated region
    $region6: #{tpu_custom_call.1} parent=1 // pred_check
      _
    $region7: #{tpu_custom_call.1} parent=1 // pred_check_branch
      %16 = sbr.rel (0) target = $region9
    $region8: #{tpu_custom_call.1} parent=1 // pred_region
      _
    $region9: #{tpu_custom_call.1} parent=1 // pred_fallthru
      _
    // Predicated region
    $region10: #{tpu_custom_call.1} parent=1 // pred_check
      _
    $region11: #{tpu_custom_call.1} parent=1 // pred_check_branch
      %18 = sbr.rel (0) target = $region13
    $region12: #{tpu_custom_call.1} parent=1 // pred_region
      _
    $region13: #{tpu_custom_call.1} parent=1 // pred_fallthru
      _
    // Predicated region
    $region14: #{tpu_custom_call.1} parent=1 // pred_check
      _
    $region15: #{tpu_custom_call.1} parent=1 // pred_check_branch
      %20 = sbr.rel (0) target = $region17
    $region16: #{tpu_custom_call.1} parent=1 // pred_region
      _
    $region17: #{tpu_custom_call.1} parent=1 // pred_fallthru
      _
    // Predicated region
    $region18: #{tpu_custom_call.1} parent=1 // pred_check
      _
    $region19: #{tpu_custom_call.1} parent=1 // pred_check_branch
      %22 = sbr.rel (0) target = $region21
    $region20: #{tpu_custom_call.1} parent=1 // pred_region
      _
    $region21: #{tpu_custom_call.1} parent=1 // pred_fallthru
      _
    // Predicated region
    $region22: #{tpu_custom_call.1} parent=1 // pred_check
      _
    $region23: #{tpu_custom_call.1} parent=1 // pred_check_branch
      %24 = sbr.rel (0) target = $region25
    $region24: #{tpu_custom_call.1} parent=1 // pred_region
      _
    $region25: #{tpu_custom_call.1} parent=1 // pred_fallthru
      _
    // Predicated region
    $region26: #{tpu_custom_call.1} parent=1 // pred_check
      _
    $region27: #{tpu_custom_call.1} parent=1 // pred_check_branch
      %26 = sbr.rel (0) target = $region29
    $region28: #{tpu_custom_call.1} parent=1 // pred_region
      _
    $region29: #{tpu_custom_call.1} parent=1 // pred_fallthru
      _
    %v28 = vld [vmem:[%s0] sm:$0xff]
    %v29 = vld [vmem:[%s0 + $0x8] sm:$0xff]
    %v30 = vld [vmem:[%s0 + $0x10] sm:$0xff]
    %v31 = vld [vmem:[%s0 + $0x18] sm:$0xff]
    %v32 = vld [vmem:[%s0 + $0x20] sm:$0xff]
    %v33 = vld [vmem:[%s0 + $0x28] sm:$0xff]
    %v34 = vld [vmem:[%s0 + $0x30] sm:$0xff]
    %v35 = vld [vmem:[%s0 + $0x38] sm:$0xff]
    %v36 = vld [vmem:[%s0 + $0x40] sm:$0xff]
    %v37 = vld [vmem:[%s0 + $0x48] sm:$0xff]
    %v38 = vld [vmem:[%s0 + $0x50] sm:$0xff]
    %v39 = vld [vmem:[%s0 + $0x58] sm:$0xff]
    %v40 = vld [vmem:[%s0 + $0x60] sm:$0xff]
    %v41 = vld [vmem:[%s0 + $0x68] sm:$0xff]
    %v42 = vld [vmem:[%s0 + $0x70] sm:$0xff]
    %v43 = vld [vmem:[%s0 + $0x78] sm:$0xff]
    %v44 = vld [vmem:[%s0 + $0x80] sm:$0xff]
    %v45 = vld [vmem:[%s0 + $0x88] sm:$0xff]
    %v46 = vld [vmem:[%s0 + $0x90] sm:$0xff]
    %v47 = vld [vmem:[%s0 + $0x98] sm:$0xff]
    %v48 = vld [vmem:[%s0 + $0xa0] sm:$0xff]
    %v49 = vld [vmem:[%s0 + $0xa8] sm:$0xff]
    %v50 = vld [vmem:[%s0 + $0xb0] sm:$0xff]
    %v51 = vld [vmem:[%s0 + $0xb8] sm:$0xff]
    %v52 = vld [vmem:[%s0 + $0xc0] sm:$0xff]
    %v53 = vld [vmem:[%s0 + $0xc8] sm:$0xff]
    %v54 = vld [vmem:[%s0 + $0xd0] sm:$0xff]
    %v55 = vld [vmem:[%s0 + $0xd8] sm:$0xff]
    %v56 = vld [vmem:[%s0 + $0xe0] sm:$0xff]
    %v57 = vld [vmem:[%s0 + $0xe8] sm:$0xff]
    %v58 = vld [vmem:[%s0 + $0xf0] sm:$0xff]
    %v59 = vld [vmem:[%s0 + $0xf8] sm:$0xff]
    %v60 = vld [vmem:[%s0 + $0x100] sm:$0xff]
    %v61 = vld [vmem:[%s0 + $0x108] sm:$0xff]
    %v62 = vld [vmem:[%s0 + $0x110] sm:$0xff]
    %v63 = vld [vmem:[%s0 + $0x118] sm:$0xff]
    %v64 = vld [vmem:[%s0 + $0x120] sm:$0xff]
    %v65 = vld [vmem:[%s0 + $0x128] sm:$0xff]
    %v66 = vld [vmem:[%s0 + $0x130] sm:$0xff]
    %v67 = vld [vmem:[%s0 + $0x138] sm:$0xff]
    %v68 = vld [vmem:[%s0 + $0x140] sm:$0xff]
    %v69 = vld [vmem:[%s0 + $0x148] sm:$0xff]
    %v70 = vld [vmem:[%s0 + $0x150] sm:$0xff]
    %v71 = vld [vmem:[%s0 + $0x158] sm:$0xff]
    %v72 = vld [vmem:[%s0 + $0x160] sm:$0xff]
    %v73 = vld [vmem:[%s0 + $0x168] sm:$0xff]
    %v74 = vld [vmem:[%s0 + $0x170] sm:$0xff]
    %v75 = vld [vmem:[%s0 + $0x178] sm:$0xff]
    %v76 = vpack.c.bf16 %v31, %v28
    %v77 = vpack.c.bf16 %v32, %v29
    %v78 = vpack.c.bf16 %v33, %v30
    %v79 = vpack.c.bf16 %v37, %v34
    %v80 = vpack.c.bf16 %v38, %v35
    %v81 = vpack.c.bf16 %v39, %v36
    %v82 = vpack.c.bf16 %v43, %v40
    %v83 = vpack.c.bf16 %v44, %v41
    %v84 = vpack.c.bf16 %v45, %v42
    %v85 = vpack.c.bf16 %v49, %v46
    %v86 = vpack.c.bf16 %v50, %v47
    %v87 = vpack.c.bf16 %v51, %v48
    %v88 = vpack.c.bf16 %v55, %v52
    %v89 = vpack.c.bf16 %v56, %v53
    %v90 = vpack.c.bf16 %v57, %v54
    %v91 = vpack.c.bf16 %v61, %v58
    %v92 = vpack.c.bf16 %v62, %v59
    %v93 = vpack.c.bf16 %v63, %v60
    %v94 = vpack.c.bf16 %v67, %v64
    %v95 = vpack.c.bf16 %v68, %v65
    %v96 = vpack.c.bf16 %v69, %v66
    %v97 = vpack.c.bf16 %v73, %v70
    %v98 = vpack.c.bf16 %v74, %v71
    %v99 = vpack.c.bf16 %v75, %v72
    %v100 = vld [vmem:[%s1] sm:$0xf]
    %v101 = vld [vmem:[%s1 + $0x4] sm:$0xf]
    %v102 = vld [vmem:[%s1 + $0x8] sm:$0xf]
    %v103 = vld [vmem:[%s1 + $0xc] sm:$0xf]
    %v104 = vld [vmem:[%s1 + $0x10] sm:$0xf]
    %v105 = vld [vmem:[%s1 + $0x14] sm:$0xf]
    %v106 = vld [vmem:[%s1 + $0x18] sm:$0xf]
    %v107 = vld [vmem:[%s1 + $0x1c] sm:$0xf]
    %v108 = vld [vmem:[%s1 + $0x20] sm:$0xf]
    %v109 = vld [vmem:[%s1 + $0x24] sm:$0xf]
    %v110 = vld [vmem:[%s1 + $0x28] sm:$0xf]
    %v111 = vld [vmem:[%s1 + $0x2c] sm:$0xf]
    %v112 = vld [vmem:[%s1 + $0x30] sm:$0xf]
    %v113 = vld [vmem:[%s1 + $0x34] sm:$0xf]
    %v114 = vld [vmem:[%s1 + $0x38] sm:$0xf]
    %v115 = vld [vmem:[%s1 + $0x3c] sm:$0xf]
    %v116 = vld [vmem:[%s1 + $0x40] sm:$0xf]
    %v117 = vld [vmem:[%s1 + $0x44] sm:$0xf]
    %v118 = vld [vmem:[%s1 + $0x48] sm:$0xf]
    %v119 = vld [vmem:[%s1 + $0x4c] sm:$0xf]
    %v120 = vld [vmem:[%s1 + $0x50] sm:$0xf]
    %v121 = vld [vmem:[%s1 + $0x54] sm:$0xf]
    %v122 = vld [vmem:[%s1 + $0x58] sm:$0xf]
    %v123 = vld [vmem:[%s1 + $0x5c] sm:$0xf]
    %v124 = vld [vmem:[%s1 + $0x60] sm:$0xf]
    %v125 = vld [vmem:[%s1 + $0x64] sm:$0xf]
    %v126 = vld [vmem:[%s1 + $0x68] sm:$0xf]
    %v127 = vld [vmem:[%s1 + $0x6c] sm:$0xf]
    %v128 = vld [vmem:[%s1 + $0x70] sm:$0xf]
    %v129 = vld [vmem:[%s1 + $0x74] sm:$0xf]
    %v130 = vld [vmem:[%s1 + $0x78] sm:$0xf]
    %v131 = vld [vmem:[%s1 + $0x7c] sm:$0xf]
    %v132 = vld [vmem:[%s1 + $0x80] sm:$0xf]
    %v133 = vld [vmem:[%s1 + $0x84] sm:$0xf]
    %v134 = vld [vmem:[%s2] sm:$0x1]
    %v136 = vlaneseq
    %v137 = vshrl.u32 %v136, 7
    %v138 = vsub.s32 0, %v137
    %v139 = vrot.slane %v134, %v138
    %v175 = vunpack.c.l.b16 %v100
    %v176 = vunpack.c.l.b16 %v101
    %v177 = vunpack.c.l.b16 %v102
    %v178 = vunpack.c.l.b16 %v103
    %v179 = vunpack.c.l.b16 %v104
    %v180 = vunpack.c.l.b16 %v105
    %v181 = vunpack.c.l.b16 %v106
    %v182 = vunpack.c.l.b16 %v107
    %v183 = vunpack.c.l.b16 %v108
    %v184 = vunpack.c.l.b16 %v109
    %v185 = vunpack.c.l.b16 %v110
    %v186 = vunpack.c.l.b16 %v111
    %v187 = vunpack.c.l.b16 %v112
    %v188 = vunpack.c.l.b16 %v113
    %v189 = vunpack.c.l.b16 %v114
    %v190 = vunpack.c.l.b16 %v115
    %v191 = vunpack.c.l.b16 %v116
    %v192 = vunpack.c.l.b16 %v117
    %v193 = vunpack.c.l.b16 %v118
    %v194 = vunpack.c.l.b16 %v119
    %v195 = vunpack.c.l.b16 %v120
    %v196 = vunpack.c.l.b16 %v121
    %v197 = vunpack.c.l.b16 %v122
    %v198 = vunpack.c.l.b16 %v123
    %v199 = vunpack.c.l.b16 %v124
    %v200 = vunpack.c.l.b16 %v125
    %v201 = vunpack.c.l.b16 %v126
    %v202 = vunpack.c.l.b16 %v127
    %v203 = vunpack.c.l.b16 %v128
    %v204 = vunpack.c.l.b16 %v129
    %v205 = vunpack.c.l.b16 %v130
    %v206 = vunpack.c.l.b16 %v131
    %v207 = vunpack.c.l.b16 %v132
    %v208 = vunpack.c.l.b16 %v133
    %v209 = vpack.c.b16 %v176, %v175
    %v210 = vpack.c.b16 %v178, %v177
    %v211 = vpack.c.b16 %v180, %v179
    %v212 = vpack.c.b16 %v182, %v181
    %v213 = vpack.c.b16 %v184, %v183
    %v214 = vpack.c.b16 %v186, %v185
    %v215 = vpack.c.b16 %v188, %v187
    %v216 = vpack.c.b16 %v190, %v189
    %v217 = vpack.c.b16 %v192, %v191
    %v218 = vpack.c.b16 %v194, %v193
    %v219 = vpack.c.b16 %v196, %v195
    %v220 = vpack.c.b16 %v198, %v197
    %v221 = vpack.c.b16 %v200, %v199
    %v222 = vpack.c.b16 %v202, %v201
    %v223 = vpack.c.b16 %v204, %v203
    %v224 = vpack.c.b16 %v206, %v205
    %v225 = vpack.c.b16 %v208, %v207
    %vm243 = vcmask 130048
    %v245 = vsel %vm243, %v78, 0
    %v248 = vsel %vm243, %v81, 0
    %v251 = vsel %vm243, %v84, 0
    %v254 = vsel %vm243, %v87, 0
    %v257 = vsel %vm243, %v90, 0
    %v260 = vsel %vm243, %v93, 0
    %v263 = vsel %vm243, %v96, 0
    %v266 = vsel %vm243, %v99, 0
    %268 = vmatprep.subr.bf16.mxu0 0
    %269 = vmatpush1.bf16.msra.mxu0 %v216
    %270 = vmatprep.subr.bf16.mxu0 0
    %271 = vmatpush1.bf16.msra.mxu0 %v215
    %272 = vmatprep.subr.bf16.mxu0 0
    %273 = vmatpush1.bf16.msra.mxu0 %v214
    %274 = vmatprep.subr.bf16.mxu0 0
    %275 = vmatpush1.bf16.msra.mxu0 %v213
    %276 = vmatprep.subr.bf16.mxu0 0
    %277 = vmatpush1.bf16.msra.mxu0 %v212
    %278 = vmatprep.subr.bf16.mxu0 0
    %279 = vmatpush1.bf16.msra.mxu0 %v211
    %280 = vmatprep.subr.bf16.mxu0 0
    %281 = vmatpush1.bf16.msra.mxu0 %v210
    %282 = vmatprep.subr.bf16.mxu0 0
    %283 = vmatpush1.bf16.msra.mxu0 %v209
    %284 = vmatprep.subr.bf16.mxu0 0
    %285 = vmatpush2.bf16.msra.mxu0 %v224
    %286 = vmatprep.subr.bf16.mxu0 0
    %287 = vmatpush2.bf16.msra.mxu0 %v223
    %288 = vmatprep.subr.bf16.mxu0 0
    %289 = vmatpush2.bf16.msra.mxu0 %v222
    %290 = vmatprep.subr.bf16.mxu0 0
    %291 = vmatpush2.bf16.msra.mxu0 %v221
    %292 = vmatprep.subr.bf16.mxu0 0
    %293 = vmatpush2.bf16.msra.mxu0 %v220
    %294 = vmatprep.subr.bf16.mxu0 0
    %295 = vmatpush2.bf16.msra.mxu0 %v219
    %296 = vmatprep.subr.bf16.mxu0 0
    %297 = vmatpush2.bf16.msra.mxu0 %v218
    %298 = vmatprep.subr.bf16.mxu0 0
    %299 = vmatpush2.bf16.msra.mxu0 %v217
    %300 = vmatprep.mubr.bf16.mxu0 %v77
    %301 = vmatmul.mubr.bf16.gmra.mxu0 %v76
    %v302 = vpop.f32.mrf.mxu0
    %v303 = vadd.f32 %v139, %v302
    %v304 = vpop.f32.mrf.mxu0
    %v305 = vpop.f32.mrf.mxu0
    %v306 = vadd.f32 %v139, %v305
    %v307 = vpop.f32.mrf.mxu0
    %308 = vmatprep.mubr.bf16.mxu0 %v80
    %309 = vmatmul.mubr.bf16.gmra.mxu0 %v79
    %v310 = vpop.f32.mrf.mxu0
    %v311 = vadd.f32 %v139, %v310
    %v312 = vpop.f32.mrf.mxu0
    %v313 = vpop.f32.mrf.mxu0
    %v314 = vadd.f32 %v139, %v313
    %v315 = vpop.f32.mrf.mxu0
    %316 = vmatprep.mubr.bf16.mxu0 %v83
    %317 = vmatmul.mubr.bf16.gmra.mxu0 %v82
    %v318 = vpop.f32.mrf.mxu0
    %v319 = vadd.f32 %v139, %v318
    %v320 = vpop.f32.mrf.mxu0
    %v321 = vpop.f32.mrf.mxu0
    %v322 = vadd.f32 %v139, %v321
    %v323 = vpop.f32.mrf.mxu0
    %324 = vmatprep.mubr.bf16.mxu0 %v86
    %325 = vmatmul.mubr.bf16.gmra.mxu0 %v85
    %v326 = vpop.f32.mrf.mxu0
    %v327 = vadd.f32 %v139, %v326
    %v328 = vpop.f32.mrf.mxu0
    %v329 = vpop.f32.mrf.mxu0
    %v330 = vadd.f32 %v139, %v329
    %v331 = vpop.f32.mrf.mxu0
    %332 = vmatprep.mubr.bf16.mxu0 %v89
    %333 = vmatmul.mubr.bf16.gmra.mxu0 %v88
    %v334 = vpop.f32.mrf.mxu0
    %v335 = vadd.f32 %v139, %v334
    %v336 = vpop.f32.mrf.mxu0
    %v337 = vpop.f32.mrf.mxu0
    %v338 = vadd.f32 %v139, %v337
    %v339 = vpop.f32.mrf.mxu0
    %340 = vmatprep.mubr.bf16.mxu0 %v92
    %341 = vmatmul.mubr.bf16.gmra.mxu0 %v91
    %v342 = vpop.f32.mrf.mxu0
    %v343 = vadd.f32 %v139, %v342
    %v344 = vpop.f32.mrf.mxu0
    %v345 = vpop.f32.mrf.mxu0
    %v346 = vadd.f32 %v139, %v345
    %v347 = vpop.f32.mrf.mxu0
    %348 = vmatprep.mubr.bf16.mxu0 %v95
    %349 = vmatmul.mubr.bf16.gmra.mxu0 %v94
    %v350 = vpop.f32.mrf.mxu0
    %v351 = vadd.f32 %v139, %v350
    %v352 = vpop.f32.mrf.mxu0
    %v353 = vpop.f32.mrf.mxu0
    %v354 = vadd.f32 %v139, %v353
    %v355 = vpop.f32.mrf.mxu0
    %356 = vmatprep.mubr.bf16.mxu0 %v98
    %357 = vmatmul.mubr.bf16.gmra.mxu0 %v97
    %v358 = vpop.f32.mrf.mxu0
    %v359 = vadd.f32 %v139, %v358
    %v360 = vpop.f32.mrf.mxu0
    %v361 = vpop.f32.mrf.mxu0
    %v362 = vadd.f32 %v139, %v361
    %v363 = vpop.f32.mrf.mxu0
    %364 = vdwg.mxu0
    %365 = vmatprep.subr.bf16.mxu0 0
    %366 = vmatpush1.bf16.msra.mxu0 0
    %367 = vmatprep.subr.bf16.mxu0 0
    %368 = vmatpush1.bf16.msra.mxu0 0
    %369 = vmatprep.subr.bf16.mxu0 0
    %370 = vmatpush1.bf16.msra.mxu0 0
    %371 = vmatprep.subr.bf16.mxu0 0
    %372 = vmatpush1.bf16.msra.mxu0 0
    %373 = vmatprep.subr.bf16.mxu0 0
    %374 = vmatpush1.bf16.msra.mxu0 0
    %375 = vmatprep.subr.bf16.mxu0 0
    %376 = vmatpush1.bf16.msra.mxu0 0
    %377 = vmatprep.subr.bf16.mxu0 0
    %378 = vmatpush1.bf16.msra.mxu0 0
    %379 = vmatprep.subr.bf16.mxu0 0
    %380 = vmatpush1.bf16.msra.mxu0 %v225
    %381 = vmatprep.subr.bf16.mxu0 0
    %382 = vmatpush2.bf16.msra.mxu0 0
    %383 = vmatprep.subr.bf16.mxu0 0
    %384 = vmatpush2.bf16.msra.mxu0 0
    %385 = vmatprep.subr.bf16.mxu0 0
    %386 = vmatpush2.bf16.msra.mxu0 0
    %387 = vmatprep.subr.bf16.mxu0 0
    %388 = vmatpush2.bf16.msra.mxu0 0
    %389 = vmatprep.subr.bf16.mxu0 0
    %390 = vmatpush2.bf16.msra.mxu0 0
    %391 = vmatprep.subr.bf16.mxu0 0
    %392 = vmatpush2.bf16.msra.mxu0 0
    %393 = vmatprep.subr.bf16.mxu0 0
    %394 = vmatpush2.bf16.msra.mxu0 0
    %395 = vmatprep.subr.bf16.mxu0 0
    %396 = vmatpush2.bf16.msra.mxu0 0
    %397 = vmatprep.mubr.bf16.mxu0 0
    %398 = vmatmul.mubr.bf16.gmra.mxu0 %v245
    %v399 = vpop.f32.mrf.mxu0
    %v400 = vadd.f32 %v303, %v399
    %v401 = vpop.f32.mrf.mxu0
    %v402 = vpop.f32.mrf.mxu0
    %v403 = vadd.f32 %v306, %v402
    %v404 = vpop.f32.mrf.mxu0
    %405 = vmatprep.mubr.bf16.mxu0 0
    %406 = vmatmul.mubr.bf16.gmra.mxu0 %v248
    %v407 = vpop.f32.mrf.mxu0
    %v408 = vadd.f32 %v311, %v407
    %v409 = vpop.f32.mrf.mxu0
    %v410 = vpop.f32.mrf.mxu0
    %v411 = vadd.f32 %v314, %v410
    %v412 = vpop.f32.mrf.mxu0
    %413 = vmatprep.mubr.bf16.mxu0 0
    %414 = vmatmul.mubr.bf16.gmra.mxu0 %v251
    %v415 = vpop.f32.mrf.mxu0
    %v416 = vadd.f32 %v319, %v415
    %v417 = vpop.f32.mrf.mxu0
    %v418 = vpop.f32.mrf.mxu0
    %v419 = vadd.f32 %v322, %v418
    %v420 = vpop.f32.mrf.mxu0
    %421 = vmatprep.mubr.bf16.mxu0 0
    %422 = vmatmul.mubr.bf16.gmra.mxu0 %v254
    %v423 = vpop.f32.mrf.mxu0
    %v424 = vadd.f32 %v327, %v423
    %v425 = vpop.f32.mrf.mxu0
    %v426 = vpop.f32.mrf.mxu0
    %v427 = vadd.f32 %v330, %v426
    %v428 = vpop.f32.mrf.mxu0
    %429 = vmatprep.mubr.bf16.mxu0 0
    %430 = vmatmul.mubr.bf16.gmra.mxu0 %v257
    %v431 = vpop.f32.mrf.mxu0
    %v432 = vadd.f32 %v335, %v431
    %v433 = vpop.f32.mrf.mxu0
    %v434 = vpop.f32.mrf.mxu0
    %v435 = vadd.f32 %v338, %v434
    %v436 = vpop.f32.mrf.mxu0
    %437 = vmatprep.mubr.bf16.mxu0 0
    %438 = vmatmul.mubr.bf16.gmra.mxu0 %v260
    %v439 = vpop.f32.mrf.mxu0
    %v440 = vadd.f32 %v343, %v439
    %v441 = vpop.f32.mrf.mxu0
    %v442 = vpop.f32.mrf.mxu0
    %v443 = vadd.f32 %v346, %v442
    %v444 = vpop.f32.mrf.mxu0
    %445 = vmatprep.mubr.bf16.mxu0 0
    %446 = vmatmul.mubr.bf16.gmra.mxu0 %v263
    %v447 = vpop.f32.mrf.mxu0
    %v448 = vadd.f32 %v351, %v447
    %v449 = vpop.f32.mrf.mxu0
    %v450 = vpop.f32.mrf.mxu0
    %v451 = vadd.f32 %v354, %v450
    %v452 = vpop.f32.mrf.mxu0
    %453 = vmatprep.mubr.bf16.mxu0 0
    %454 = vmatmul.mubr.bf16.gmra.mxu0 %v266
    %v455 = vpop.f32.mrf.mxu0
    %v456 = vadd.f32 %v359, %v455
    %v457 = vpop.f32.mrf.mxu0
    %v458 = vpop.f32.mrf.mxu0
    %v459 = vadd.f32 %v362, %v458
    %v460 = vpop.f32.mrf.mxu0
    %461 = vdwg.mxu0
    %v462 = vmax.f32 %v400, 0.0
    %v463 = vmax.f32 %v403, 0.0
    %v464 = vmax.f32 %v408, 0.0
    %v465 = vmax.f32 %v411, 0.0
    %v466 = vmax.f32 %v416, 0.0
    %v467 = vmax.f32 %v419, 0.0
    %v468 = vmax.f32 %v424, 0.0
    %v469 = vmax.f32 %v427, 0.0
    %v470 = vmax.f32 %v432, 0.0
    %v471 = vmax.f32 %v435, 0.0
    %v472 = vmax.f32 %v440, 0.0
    %v473 = vmax.f32 %v443, 0.0
    %v474 = vmax.f32 %v448, 0.0
    %v475 = vmax.f32 %v451, 0.0
    %v476 = vmax.f32 %v456, 0.0
    %v477 = vmax.f32 %v459, 0.0
    %v478 = vpack.c.bf16 %v463, %v462
    %v479 = vpack.c.bf16 %v465, %v464
    %v480 = vpack.c.bf16 %v467, %v466
    %v481 = vpack.c.bf16 %v469, %v468
    %v482 = vpack.c.bf16 %v471, %v470
    %v483 = vpack.c.bf16 %v473, %v472
    %v484 = vpack.c.bf16 %v475, %v474
    %v485 = vpack.c.bf16 %v477, %v476
    %v486 = vld [vmem:[%s3] sm:$0xf]
    %v487 = vld [vmem:[%s3 + $0x4] sm:$0xf]
    %v488 = vld [vmem:[%s3 + $0x8] sm:$0xf]
    %v489 = vld [vmem:[%s3 + $0xc] sm:$0xf]
    %v490 = vld [vmem:[%s3 + $0x10] sm:$0xf]
    %v491 = vld [vmem:[%s3 + $0x14] sm:$0xf]
    %v492 = vld [vmem:[%s3 + $0x18] sm:$0xf]
    %v493 = vld [vmem:[%s3 + $0x1c] sm:$0xf]
    %v494 = vld [vmem:[%s4] sm:$0x1]
    %v496 = vlaneseq
    %v497 = vshrl.u32 %v496, 7
    %v498 = vsub.s32 0, %v497
    %v499 = vrot.slane %v494, %v498
    %v509 = vunpack.c.l.b16 %v486
    %v510 = vunpack.c.l.b16 %v487
    %v511 = vunpack.c.l.b16 %v488
    %v512 = vunpack.c.l.b16 %v489
    %v513 = vunpack.c.l.b16 %v490
    %v514 = vunpack.c.l.b16 %v491
    %v515 = vunpack.c.l.b16 %v492
    %v516 = vunpack.c.l.b16 %v493
    %v517 = vpack.c.b16 %v510, %v509
    %v518 = vpack.c.b16 %v512, %v511
    %v519 = vpack.c.b16 %v514, %v513
    %v520 = vpack.c.b16 %v516, %v515
    %vm525 = vcmask 523264
    %v527 = vsel %vm525, %v478, 0
    %v530 = vsel %vm525, %v479, 0
    %v533 = vsel %vm525, %v480, 0
    %v536 = vsel %vm525, %v481, 0
    %v539 = vsel %vm525, %v482, 0
    %v542 = vsel %vm525, %v483, 0
    %v545 = vsel %vm525, %v484, 0
    %v548 = vsel %vm525, %v485, 0
    %550 = vmatprep.subr.bf16.mxu0 0
    %551 = vmatpush1.bf16.msra.mxu0 0
    %552 = vmatprep.subr.bf16.mxu0 0
    %553 = vmatpush1.bf16.msra.mxu0 0
    %554 = vmatprep.subr.bf16.mxu0 0
    %555 = vmatpush1.bf16.msra.mxu0 0
    %556 = vmatprep.subr.bf16.mxu0 0
    %557 = vmatpush1.bf16.msra.mxu0 0
    %558 = vmatprep.subr.bf16.mxu0 0
    %559 = vmatpush1.bf16.msra.mxu0 %v520
    %560 = vmatprep.subr.bf16.mxu0 0
    %561 = vmatpush1.bf16.msra.mxu0 %v519
    %562 = vmatprep.subr.bf16.mxu0 0
    %563 = vmatpush1.bf16.msra.mxu0 %v518
    %564 = vmatprep.subr.bf16.mxu0 0
    %565 = vmatpush1.bf16.msra.mxu0 %v517
    %566 = vmatprep.subr.bf16.mxu0 0
    %567 = vmatpush2.bf16.msra.mxu0 0
    %568 = vmatprep.subr.bf16.mxu0 0
    %569 = vmatpush2.bf16.msra.mxu0 0
    %570 = vmatprep.subr.bf16.mxu0 0
    %571 = vmatpush2.bf16.msra.mxu0 0
    %572 = vmatprep.subr.bf16.mxu0 0
    %573 = vmatpush2.bf16.msra.mxu0 0
    %574 = vmatprep.subr.bf16.mxu0 0
    %575 = vmatpush2.bf16.msra.mxu0 0
    %576 = vmatprep.subr.bf16.mxu0 0
    %577 = vmatpush2.bf16.msra.mxu0 0
    %578 = vmatprep.subr.bf16.mxu0 0
    %579 = vmatpush2.bf16.msra.mxu0 0
    %580 = vmatprep.subr.bf16.mxu0 0
    %581 = vmatpush2.bf16.msra.mxu0 0
    %582 = vmatprep.mubr.bf16.mxu0 0
    %583 = vmatmul.mubr.bf16.gmra.mxu0 %v527
    %v584 = vpop.f32.mrf.mxu0
    %v585 = vadd.f32 %v499, %v584
    %v586 = vpop.f32.mrf.mxu0
    %v587 = vpop.f32.mrf.mxu0
    %v588 = vadd.f32 %v499, %v587
    %v589 = vpop.f32.mrf.mxu0
    %590 = vmatprep.mubr.bf16.mxu0 0
    %591 = vmatmul.mubr.bf16.gmra.mxu0 %v530
    %v592 = vpop.f32.mrf.mxu0
    %v593 = vadd.f32 %v499, %v592
    %v594 = vpop.f32.mrf.mxu0
    %v595 = vpop.f32.mrf.mxu0
    %v596 = vadd.f32 %v499, %v595
    %v597 = vpop.f32.mrf.mxu0
    %598 = vmatprep.mubr.bf16.mxu0 0
    %599 = vmatmul.mubr.bf16.gmra.mxu0 %v533
    %v600 = vpop.f32.mrf.mxu0
    %v601 = vadd.f32 %v499, %v600
    %v602 = vpop.f32.mrf.mxu0
    %v603 = vpop.f32.mrf.mxu0
    %v604 = vadd.f32 %v499, %v603
    %v605 = vpop.f32.mrf.mxu0
    %606 = vmatprep.mubr.bf16.mxu0 0
    %607 = vmatmul.mubr.bf16.gmra.mxu0 %v536
    %v608 = vpop.f32.mrf.mxu0
    %v609 = vadd.f32 %v499, %v608
    %v610 = vpop.f32.mrf.mxu0
    %v611 = vpop.f32.mrf.mxu0
    %v612 = vadd.f32 %v499, %v611
    %v613 = vpop.f32.mrf.mxu0
    %614 = vmatprep.mubr.bf16.mxu0 0
    %615 = vmatmul.mubr.bf16.gmra.mxu0 %v539
    %v616 = vpop.f32.mrf.mxu0
    %v617 = vadd.f32 %v499, %v616
    %v618 = vpop.f32.mrf.mxu0
    %v619 = vpop.f32.mrf.mxu0
    %v620 = vadd.f32 %v499, %v619
    %v621 = vpop.f32.mrf.mxu0
    %622 = vmatprep.mubr.bf16.mxu0 0
    %623 = vmatmul.mubr.bf16.gmra.mxu0 %v542
    %v624 = vpop.f32.mrf.mxu0
    %v625 = vadd.f32 %v499, %v624
    %v626 = vpop.f32.mrf.mxu0
    %v627 = vpop.f32.mrf.mxu0
    %v628 = vadd.f32 %v499, %v627
    %v629 = vpop.f32.mrf.mxu0
    %630 = vmatprep.mubr.bf16.mxu0 0
    %631 = vmatmul.mubr.bf16.gmra.mxu0 %v545
    %v632 = vpop.f32.mrf.mxu0
    %v633 = vadd.f32 %v499, %v632
    %v634 = vpop.f32.mrf.mxu0
    %v635 = vpop.f32.mrf.mxu0
    %v636 = vadd.f32 %v499, %v635
    %v637 = vpop.f32.mrf.mxu0
    %638 = vmatprep.mubr.bf16.mxu0 0
    %639 = vmatmul.mubr.bf16.gmra.mxu0 %v548
    %v640 = vpop.f32.mrf.mxu0
    %v641 = vadd.f32 %v499, %v640
    %v642 = vpop.f32.mrf.mxu0
    %v643 = vpop.f32.mrf.mxu0
    %v644 = vadd.f32 %v499, %v643
    %v645 = vpop.f32.mrf.mxu0
    %646 = vdwg.mxu0
    %v647 = vmax.f32 %v585, 0.0
    %v648 = vmax.f32 %v588, 0.0
    %v649 = vmax.f32 %v593, 0.0
    %v650 = vmax.f32 %v596, 0.0
    %v651 = vmax.f32 %v601, 0.0
    %v652 = vmax.f32 %v604, 0.0
    %v653 = vmax.f32 %v609, 0.0
    %v654 = vmax.f32 %v612, 0.0
    %v655 = vmax.f32 %v617, 0.0
    %v656 = vmax.f32 %v620, 0.0
    %v657 = vmax.f32 %v625, 0.0
    %v658 = vmax.f32 %v628, 0.0
    %v659 = vmax.f32 %v633, 0.0
    %v660 = vmax.f32 %v636, 0.0
    %v661 = vmax.f32 %v641, 0.0
    %v662 = vmax.f32 %v644, 0.0
    %v663 = vpack.c.bf16 %v648, %v647
    %v664 = vpack.c.bf16 %v650, %v649
    %v665 = vpack.c.bf16 %v652, %v651
    %v666 = vpack.c.bf16 %v654, %v653
    %v667 = vpack.c.bf16 %v656, %v655
    %v668 = vpack.c.bf16 %v658, %v657
    %v669 = vpack.c.bf16 %v660, %v659
    %v670 = vpack.c.bf16 %v662, %v661
    %v671 = vld [vmem:[%s5] sm:$0xf]
    %v672 = vld [vmem:[%s5 + $0x4] sm:$0xf]
    %v673 = vld [vmem:[%s5 + $0x8] sm:$0xf]
    %v674 = vld [vmem:[%s5 + $0xc] sm:$0xf]
    %v675 = vld [vmem:[%s6] sm:$0x1]
    %v677 = vlaneseq
    %v678 = vshrl.u32 %v677, 7
    %v679 = vsub.s32 0, %v678
    %v680 = vrot.slane %v675, %v679
    %v686 = vunpack.c.l.b16 %v671
    %v687 = vunpack.c.l.b16 %v672
    %v688 = vunpack.c.l.b16 %v673
    %v689 = vunpack.c.l.b16 %v674
    %v690 = vpack.c.b16 %v687, %v686
    %v691 = vpack.c.b16 %v689, %v688
    %vm694 = vcmask 261120
    %v696 = vsel %vm694, %v663, 0
    %v699 = vsel %vm694, %v664, 0
    %v702 = vsel %vm694, %v665, 0
    %v705 = vsel %vm694, %v666, 0
    %v708 = vsel %vm694, %v667, 0
    %v711 = vsel %vm694, %v668, 0
    %v714 = vsel %vm694, %v669, 0
    %v717 = vsel %vm694, %v670, 0
    %719 = vmatprep.subr.bf16.mxu0 0
    %720 = vmatpush1.bf16.msra.mxu0 0
    %721 = vmatprep.subr.bf16.mxu0 0
    %722 = vmatpush1.bf16.msra.mxu0 0
    %723 = vmatprep.subr.bf16.mxu0 0
    %724 = vmatpush1.bf16.msra.mxu0 0
    %725 = vmatprep.subr.bf16.mxu0 0
    %726 = vmatpush1.bf16.msra.mxu0 0
    %727 = vmatprep.subr.bf16.mxu0 0
    %728 = vmatpush1.bf16.msra.mxu0 0
    %729 = vmatprep.subr.bf16.mxu0 0
    %730 = vmatpush1.bf16.msra.mxu0 0
    %731 = vmatprep.subr.bf16.mxu0 0
    %732 = vmatpush1.bf16.msra.mxu0 %v691
    %733 = vmatprep.subr.bf16.mxu0 0
    %734 = vmatpush1.bf16.msra.mxu0 %v690
    %735 = vmatprep.subr.bf16.mxu0 0
    %736 = vmatpush2.bf16.msra.mxu0 0
    %737 = vmatprep.subr.bf16.mxu0 0
    %738 = vmatpush2.bf16.msra.mxu0 0
    %739 = vmatprep.subr.bf16.mxu0 0
    %740 = vmatpush2.bf16.msra.mxu0 0
    %741 = vmatprep.subr.bf16.mxu0 0
    %742 = vmatpush2.bf16.msra.mxu0 0
    %743 = vmatprep.subr.bf16.mxu0 0
    %744 = vmatpush2.bf16.msra.mxu0 0
    %745 = vmatprep.subr.bf16.mxu0 0
    %746 = vmatpush2.bf16.msra.mxu0 0
    %747 = vmatprep.subr.bf16.mxu0 0
    %748 = vmatpush2.bf16.msra.mxu0 0
    %749 = vmatprep.subr.bf16.mxu0 0
    %750 = vmatpush2.bf16.msra.mxu0 0
    %751 = vmatprep.mubr.bf16.mxu0 0
    %752 = vmatmul.mubr.bf16.gmra.mxu0 %v696
    %v753 = vpop.f32.mrf.mxu0
    %v754 = vadd.f32 %v680, %v753
    %v755 = vpop.f32.mrf.mxu0
    %v756 = vpop.f32.mrf.mxu0
    %v757 = vadd.f32 %v680, %v756
    %v758 = vpop.f32.mrf.mxu0
    %759 = vmatprep.mubr.bf16.mxu0 0
    %760 = vmatmul.mubr.bf16.gmra.mxu0 %v699
    %v761 = vpop.f32.mrf.mxu0
    %v762 = vadd.f32 %v680, %v761
    %v763 = vpop.f32.mrf.mxu0
    %v764 = vpop.f32.mrf.mxu0
    %v765 = vadd.f32 %v680, %v764
    %v766 = vpop.f32.mrf.mxu0
    %767 = vmatprep.mubr.bf16.mxu0 0
    %768 = vmatmul.mubr.bf16.gmra.mxu0 %v702
    %v769 = vpop.f32.mrf.mxu0
    %v770 = vadd.f32 %v680, %v769
    %v771 = vpop.f32.mrf.mxu0
    %v772 = vpop.f32.mrf.mxu0
    %v773 = vadd.f32 %v680, %v772
    %v774 = vpop.f32.mrf.mxu0
    %775 = vmatprep.mubr.bf16.mxu0 0
    %776 = vmatmul.mubr.bf16.gmra.mxu0 %v705
    %v777 = vpop.f32.mrf.mxu0
    %v778 = vadd.f32 %v680, %v777
    %v779 = vpop.f32.mrf.mxu0
    %v780 = vpop.f32.mrf.mxu0
    %v781 = vadd.f32 %v680, %v780
    %v782 = vpop.f32.mrf.mxu0
    %783 = vmatprep.mubr.bf16.mxu0 0
    %784 = vmatmul.mubr.bf16.gmra.mxu0 %v708
    %v785 = vpop.f32.mrf.mxu0
    %v786 = vadd.f32 %v680, %v785
    %v787 = vpop.f32.mrf.mxu0
    %v788 = vpop.f32.mrf.mxu0
    %v789 = vadd.f32 %v680, %v788
    %v790 = vpop.f32.mrf.mxu0
    %791 = vmatprep.mubr.bf16.mxu0 0
    %792 = vmatmul.mubr.bf16.gmra.mxu0 %v711
    %v793 = vpop.f32.mrf.mxu0
    %v794 = vadd.f32 %v680, %v793
    %v795 = vpop.f32.mrf.mxu0
    %v796 = vpop.f32.mrf.mxu0
    %v797 = vadd.f32 %v680, %v796
    %v798 = vpop.f32.mrf.mxu0
    %799 = vmatprep.mubr.bf16.mxu0 0
    %800 = vmatmul.mubr.bf16.gmra.mxu0 %v714
    %v801 = vpop.f32.mrf.mxu0
    %v802 = vadd.f32 %v680, %v801
    %v803 = vpop.f32.mrf.mxu0
    %v804 = vpop.f32.mrf.mxu0
    %v805 = vadd.f32 %v680, %v804
    %v806 = vpop.f32.mrf.mxu0
    %807 = vmatprep.mubr.bf16.mxu0 0
    %808 = vmatmul.mubr.bf16.gmra.mxu0 %v717
    %v809 = vpop.f32.mrf.mxu0
    %v810 = vadd.f32 %v680, %v809
    %v811 = vpop.f32.mrf.mxu0
    %v812 = vpop.f32.mrf.mxu0
    %v813 = vadd.f32 %v680, %v812
    %v814 = vpop.f32.mrf.mxu0
    %815 = vdwg.mxu0
    %816 = vst [vmem:[#allocation2] sm:$0xff] %v754
    %817 = vst [vmem:[#allocation2 + $0x8] sm:$0xff] %v757
    %818 = vst [vmem:[#allocation2 + $0x10] sm:$0xff] %v762
    %819 = vst [vmem:[#allocation2 + $0x18] sm:$0xff] %v765
    %820 = vst [vmem:[#allocation2 + $0x20] sm:$0xff] %v770
    %821 = vst [vmem:[#allocation2 + $0x28] sm:$0xff] %v773
    %822 = vst [vmem:[#allocation2 + $0x30] sm:$0xff] %v778
    %823 = vst [vmem:[#allocation2 + $0x38] sm:$0xff] %v781
    %824 = vst [vmem:[#allocation2 + $0x40] sm:$0xff] %v786
    %825 = vst [vmem:[#allocation2 + $0x48] sm:$0xff] %v789
    %826 = vst [vmem:[#allocation2 + $0x50] sm:$0xff] %v794
    %827 = vst [vmem:[#allocation2 + $0x58] sm:$0xff] %v797
    %828 = vst [vmem:[#allocation2 + $0x60] sm:$0xff] %v802
    %829 = vst [vmem:[#allocation2 + $0x68] sm:$0xff] %v805
    %830 = vst [vmem:[#allocation2 + $0x70] sm:$0xff] %v810
    %831 = vst [vmem:[#allocation2 + $0x78] sm:$0xff] %v813
    // Predicated region
    $region30: #{tpu_custom_call.1} parent=1 // pred_check
      _
    $region31: #{tpu_custom_call.1} parent=1 // pred_check_branch
      %833 = sbr.rel (0) target = $region33
    $region32: #{tpu_custom_call.1} parent=1 // pred_region
      %s835 = ssub.s32 2048, 2048
      %836 = vsyncadd [#allocation3], %s835
      %s837 = sshll.u32 [#allocation2], 4
      %s838 = int_to_ptr.vmem [resolvable:$true] %s837
      %843 = dma.vmem_to_hbm [thread:$0]  %s838, 2048, %s7, [#allocation3], 128, 128, 8
    $region33: #{tpu_custom_call.1} parent=1 // pred_fallthru
      _
    // Predicated region
    $region34: #{tpu_custom_call.1} parent=1 // pred_check
      _
    $region35: #{tpu_custom_call.1} parent=1 // pred_check_branch
      %845 = sbr.rel (0) target = $region37
    $region36: #{tpu_custom_call.1} parent=1 // pred_region
      %846 = dma.done [#allocation3], 2048
    $region37: #{tpu_custom_call.1} parent=1 // pred_fallthru
      _
    %847 = vsyncpa [#allocation3], 1

</llo_original>
